<compile_context>
chip_gen: v7x
topology: tpu7x:2x2x1
jax: 0.10.0
libtpu: 0.0.40
codegen_flags: <defaults>
</compile_context>

<pallas_src>
import math

import jax
import jax.numpy as jnp
from jax.experimental import pallas as pl
from jax.experimental.pallas import tpu as pltpu


def time_embed_kernel(x_ref, w1_ref, b1_ref, w2_ref, b2_ref, o_ref):
    # First Linear: bf16 operands, f32 accumulation (MXU native fast path).
    h = jnp.dot(x_ref[...], w1_ref[...], preferred_element_type=jnp.float32)
    h = h + b1_ref[...]                      # f32 bias add (VPU)
    h = h * jax.nn.sigmoid(h)                # SiLU in f32 (EUP)
    # Drop back to bf16 so the second matmul also runs the fast MXU path.
    h = h.astype(jnp.bfloat16)
    # Second Linear.
    y = jnp.dot(h, w2_ref[...], preferred_element_type=jnp.float32)
    y = y + b2_ref[...]
    o_ref[...] = y.astype(o_ref.dtype)


def time_embed_forward(t_emb, w1, b1, w2, b2, *, block_b=128):
    """Mirrors TimeEmbedModule.forward: cast input to half precision (bf16 on
    TPU) and run the fused Linear -> SiLU -> Linear MLP in one Pallas call."""
    # TODO(synk): PyTorch uses fp16 for .half(); bf16 is substituted here as
    # the TPU-native half-precision type (fp16 matmul is not MXU-native).
    t_emb = t_emb.astype(jnp.bfloat16)
    w1 = w1.astype(jnp.bfloat16)
    w2 = w2.astype(jnp.bfloat16)

    B, Din = t_emb.shape
    H = w1.shape[1]

    # Pre-cast biases once (f32, lane-dense (1, H)) so there is no per-call
    # cast work inside the kernel.
    b1_2d = b1.astype(jnp.float32).reshape(1, H)
    b2_2d = b2.astype(jnp.float32).reshape(1, H)

    bb = min(B, block_b)
    grid = (pl.cdiv(B, bb),)

    # Advisory cost hint: this kernel is weight-streaming bound, not
    # compute bound, at realistic SD sizes.
    flops = 2 * B * Din * H + 2 * B * H * H
    bytes_accessed = (
        t_emb.size * t_emb.dtype.itemsize
        + w1.size * w1.dtype.itemsize
        + w2.size * w2.dtype.itemsize
        + b1_2d.size * 4
        + b2_2d.size * 4
        + B * H * 2  # bf16 output
    )
    cost = pl.CostEstimate(
        flops=flops, transcendentals=B * H, bytes_accessed=bytes_accessed
    )

    out = pl.pallas_call(
        time_embed_kernel,
        out_shape=jax.ShapeDtypeStruct((B, H), jnp.bfloat16),
        grid=grid,
        in_specs=[
            pl.BlockSpec((bb, Din), lambda i: (i, 0)),   # x tile over batch
            pl.BlockSpec((Din, H), lambda i: (0, 0)),    # w1: VMEM-resident
            pl.BlockSpec((1, H), lambda i: (0, 0)),      # b1 (f32)
            pl.BlockSpec((H, H), lambda i: (0, 0)),      # w2: VMEM-resident
            pl.BlockSpec((1, H), lambda i: (0, 0)),      # b2 (f32)
        ],
        out_specs=pl.BlockSpec((bb, H), lambda i: (i, 0)),
        compiler_params=pltpu.CompilerParams(
            dimension_semantics=("parallel",)
        ),
        cost_estimate=cost,
    )(t_emb, w1, b1_2d, w2, b2_2d)
    return out


def init_time_embed_params(key, model_channels, time_embed_dim):
    """Deterministic synthetic params for Sequential(Linear, SiLU, Linear).

    PyTorch Linear default init: U(-1/sqrt(fan_in), 1/sqrt(fan_in)).
    Weights stored as (in, out) for x @ W inside the kernel; bf16 storage
    (TPU-native half precision).
    """
    k1, k2, k3, k4 = jax.random.split(key, 4)
    bound1 = 1.0 / math.sqrt(model_channels)
    bound2 = 1.0 / math.sqrt(time_embed_dim)
    w1 = jax.random.uniform(
        k1, (model_channels, time_embed_dim), jnp.float32, -bound1, bound1
    ).astype(jnp.bfloat16)
    b1 = jax.random.uniform(
        k2, (time_embed_dim,), jnp.float32, -bound1, bound1
    ).astype(jnp.bfloat16)
    w2 = jax.random.uniform(
        k3, (time_embed_dim, time_embed_dim), jnp.float32, -bound2, bound2
    ).astype(jnp.bfloat16)
    b2 = jax.random.uniform(
        k4, (time_embed_dim,), jnp.float32, -bound2, bound2
    ).astype(jnp.bfloat16)
    return w1, b1, w2, b2


if __name__ == "__main__":
    # Small shapes consistent with a time-embedding MLP:
    # batch=8 timesteps, model_channels=32, time_embed_dim=128.
    B, C, H = 8, 32, 128
    key = jax.random.PRNGKey(0)
    k_x, k_p = jax.random.split(key)

    # Incoming timestep embedding (arrives fp32; forward casts to bf16).
    t_emb = jax.random.normal(k_x, (B, C), dtype=jnp.float32)
    w1, b1, w2, b2 = init_time_embed_params(k_p, C, H)

    out = time_embed_forward(t_emb, w1, b1, w2, b2)
    out = jax.block_until_ready(out)

    # Reference check in plain JAX (same bf16-in / f32-accumulate semantics).
    xh = t_emb.astype(jnp.bfloat16).astype(jnp.float32)
    h_ref = xh @ w1.astype(jnp.float32) + b1.astype(jnp.float32)
    h_ref = h_ref * jax.nn.sigmoid(h_ref)
    h_ref = h_ref.astype(jnp.bfloat16).astype(jnp.float32)
    y_ref = (h_ref @ w2.astype(jnp.float32) + b2.astype(jnp.float32)).astype(
        jnp.bfloat16
    )
    assert out.shape == (B, H) and out.dtype == jnp.bfloat16
    assert jnp.allclose(
        out.astype(jnp.float32), y_ref.astype(jnp.float32), atol=2e-2, rtol=2e-2
    )
    print("KERNEL_OK")
</pallas_src>

<mosaic_0001>
module attributes {stable_mosaic.version = 11 : i64} {
  func.func @time_embed_kernel(%arg0: i32, %arg1: memref<8x32xbf16, #tpu.memory_space<vmem>>, %arg2: memref<32x128xbf16, #tpu.memory_space<vmem>>, %arg3: memref<1x128xf32, #tpu.memory_space<vmem>>, %arg4: memref<128x128xbf16, #tpu.memory_space<vmem>>, %arg5: memref<1x128xf32, #tpu.memory_space<vmem>>, %arg6: memref<8x128xbf16, #tpu.memory_space<vmem>>) attributes {dimension_semantics = [#tpu.dimension_semantics<parallel>], iteration_bounds = array<i64: 1>, scalar_prefetch = 0 : i64, scratch_operands = 0 : i64, tpu.core_type = #tpu.core_type<tc>, window_params = [{transform_indices = @transform_0, window_bounds = array<i64: 8, 32>}, {pipeline_mode = #tpu.pipeline_mode<synchronous>, transform_indices = @transform_1, window_bounds = array<i64: 32, 128>}, {pipeline_mode = #tpu.pipeline_mode<synchronous>, transform_indices = @transform_2, window_bounds = array<i64: 1, 128>}, {pipeline_mode = #tpu.pipeline_mode<synchronous>, transform_indices = @transform_3, window_bounds = array<i64: 128, 128>}, {pipeline_mode = #tpu.pipeline_mode<synchronous>, transform_indices = @transform_4, window_bounds = array<i64: 1, 128>}, {transform_indices = @transform_5, window_bounds = array<i64: 8, 128>}]} {
    %c0 = arith.constant 0 : index
    %c0_0 = arith.constant 0 : index
    %0 = vector.load %arg1[%c0, %c0_0] : memref<8x32xbf16, #tpu.memory_space<vmem>>, vector<8x32xbf16>
    %c0_1 = arith.constant 0 : index
    %c0_2 = arith.constant 0 : index
    %1 = vector.load %arg2[%c0_1, %c0_2] : memref<32x128xbf16, #tpu.memory_space<vmem>>, vector<32x128xbf16>
    %cst = arith.constant dense<0.000000e+00> : vector<8x128xf32>
    %2 = tpu.matmul %0, %1, %cst {dimension_numbers = #tpu.dot_dimension_numbers<[1], [0], [0], [1], [0, 0, 1, 1], [], []>} : vector<8x32xbf16>, vector<32x128xbf16>, vector<8x128xf32> -> vector<8x128xf32>
    %c0_3 = arith.constant 0 : index
    %c0_4 = arith.constant 0 : index
    %3 = vector.load %arg3[%c0_3, %c0_4] : memref<1x128xf32, #tpu.memory_space<vmem>>, vector<1x128xf32>
    %4 = vector.broadcast %3 : vector<1x128xf32> to vector<8x128xf32>
    %5 = arith.addf %2, %4 : vector<8x128xf32>
    %6 = arith.negf %5 : vector<8x128xf32>
    %7 = math.exp %6 : vector<8x128xf32>
    %cst_5 = arith.constant 1.000000e+00 : f32
    %8 = vector.broadcast %cst_5 : f32 to vector<8x128xf32>
    %9 = arith.addf %8, %7 : vector<8x128xf32>
    %10 = arith.divf %8, %9 : vector<8x128xf32>
    %11 = arith.mulf %5, %10 : vector<8x128xf32>
    %12 = arith.truncf %11 : vector<8x128xf32> to vector<8x128xbf16>
    %c0_6 = arith.constant 0 : index
    %c0_7 = arith.constant 0 : index
    %13 = vector.load %arg4[%c0_6, %c0_7] : memref<128x128xbf16, #tpu.memory_space<vmem>>, vector<128x128xbf16>
    %cst_8 = arith.constant dense<0.000000e+00> : vector<8x128xf32>
    %14 = tpu.matmul %12, %13, %cst_8 {dimension_numbers = #tpu.dot_dimension_numbers<[1], [0], [0], [1], [0, 0, 1, 1], [], []>} : vector<8x128xbf16>, vector<128x128xbf16>, vector<8x128xf32> -> vector<8x128xf32>
    %c0_9 = arith.constant 0 : index
    %c0_10 = arith.constant 0 : index
    %15 = vector.load %arg5[%c0_9, %c0_10] : memref<1x128xf32, #tpu.memory_space<vmem>>, vector<1x128xf32>
    %16 = vector.broadcast %15 : vector<1x128xf32> to vector<8x128xf32>
    %17 = arith.addf %14, %16 : vector<8x128xf32>
    %18 = arith.truncf %17 : vector<8x128xf32> to vector<8x128xbf16>
    %c0_11 = arith.constant 0 : index
    %c0_12 = arith.constant 0 : index
    %19 = vector.load %arg6[%c0_11, %c0_12] : memref<8x128xbf16, #tpu.memory_space<vmem>>, vector<8x128xbf16>
    tpu.vector_store %arg6[%c0_11, %c0_12], %18 {strides = array<i32>} : memref<8x128xbf16, #tpu.memory_space<vmem>>, vector<8x128xbf16>,
    return
  }
  func.func @transform_0(%arg0: i32) -> (i32, i32) {
    %c0_i32 = arith.constant 0 : i32
    %c0_i32_0 = arith.constant 0 : i32
    return %arg0, %c0_i32 : i32, i32
  }
  func.func @transform_1(%arg0: i32) -> (i32, i32) {
    %c0_i32 = arith.constant 0 : i32
    %c0_i32_0 = arith.constant 0 : i32
    %c0_i32_1 = arith.constant 0 : i32
    return %c0_i32, %c0_i32_0 : i32, i32
  }
  func.func @transform_2(%arg0: i32) -> (i32, i32) {
    %c0_i32 = arith.constant 0 : i32
    %c0_i32_0 = arith.constant 0 : i32
    %c0_i32_1 = arith.constant 0 : i32
    return %c0_i32, %c0_i32_0 : i32, i32
  }
  func.func @transform_3(%arg0: i32) -> (i32, i32) {
    %c0_i32 = arith.constant 0 : i32
    %c0_i32_0 = arith.constant 0 : i32
    %c0_i32_1 = arith.constant 0 : i32
    return %c0_i32, %c0_i32_0 : i32, i32
  }
  func.func @transform_4(%arg0: i32) -> (i32, i32) {
    %c0_i32 = arith.constant 0 : i32
    %c0_i32_0 = arith.constant 0 : i32
    %c0_i32_1 = arith.constant 0 : i32
    return %c0_i32, %c0_i32_0 : i32, i32
  }
  func.func @transform_5(%arg0: i32) -> (i32, i32) {
    %c0_i32 = arith.constant 0 : i32
    %c0_i32_0 = arith.constant 0 : i32
    return %arg0, %c0_i32 : i32, i32
  }
}

</mosaic_0001>

<llo_original>
// kernel: tpu_custom_call.1
$region0: #{tpu_custom_call.1}
  #allocation0 [shape = 'u32[]', space=smem, size = 0x4, offset = 0x4, fixed_abs, tag = 'smem constant byte address 0x4 - core index']
  #allocation1 [shape = 'u32[144,128]{1,0:T(1,128)}', space=vmem, size = 0x12000, scoped, tag = 'internal scratch']
  %s0 = inlined_call_operand.hbm [shape: bf16[8,32], index: 0, kind: input, shape index: {}]
  %s1 = inlined_call_operand.hbm [shape: bf16[32,128], index: 1, kind: input, shape index: {}]
  %s2 = inlined_call_operand.vmem [shape: f32[1,128], index: 2, kind: input, shape index: {}]
  %s3 = inlined_call_operand.hbm [shape: bf16[128,128], index: 3, kind: input, shape index: {}]
  %s4 = inlined_call_operand.vmem [shape: f32[1,128], index: 4, kind: input, shape index: {}]
  %s5 = inlined_call_operand.hbm [shape: bf16[8,128], index: 5, kind: output, shape index: {}]
  %s6 = sld [smem:[#allocation0]]
  $region42: #{tpu_custom_call.1} parent=0
    _
  %s8 = ssub.s32 1, %s6
  %s9 = scalar_select 0, %s8, %s6
  $region1: #{tpu_custom_call.1} parent=0
    #allocation2 [shape = 'u8[2048]{0}', space=vmem, size = 0x800, scoped, tag = 'input window, operand 0, single buffered']
    #allocation3 [shape = 's32[1]{0}', space=sflag, size = 0x4, scoped, tag = 'scoped memory for tpu_custom_call.1']
    #allocation4 [shape = 's32[1]{0}', space=sflag, size = 0x4, scoped, tag = 'scoped memory for tpu_custom_call.1']
    #allocation5 [shape = 'u8[8192]{0}', space=vmem, size = 0x2000, scoped, tag = 'input window, operand 1, single buffered']
    #allocation6 [shape = 's32[1]{0}', space=sflag, size = 0x4, scoped, tag = 'scoped memory for tpu_custom_call.1']
    #allocation7 [shape = 'u8[32768]{0}', space=vmem, size = 0x8000, scoped, tag = 'input window, operand 3, single buffered']
    #allocation8 [shape = 'u8[2048]{0}', space=vmem, size = 0x800, scoped, tag = 'output window, operand 0, single buffered']
    %10 = vsyncpa [#allocation3], 0
    %11 = vsyncpa [#allocation6], 0
    %12 = vsyncpa [#allocation4], 0
    // Predicated region
    $region2: #{tpu_custom_call.1} parent=1 // pred_check
      _
    $region3: #{tpu_custom_call.1} parent=1 // pred_check_branch
      %14 = sbr.rel (0) target = $region5
    $region4: #{tpu_custom_call.1} parent=1 // pred_region
      %s16 = ssub.s32 64, 64
      %17 = vsyncadd [#allocation3], %s16
      %s19 = sshll.u32 [#allocation2], 4
      %s20 = int_to_ptr.vmem [resolvable:$true] %s19
      %22 = dma.hbm_to_vmem [thread:$0]  %s0, 64, %s20, [#allocation3]
    $region5: #{tpu_custom_call.1} parent=1 // pred_fallthru
      _
    // Predicated region
    $region6: #{tpu_custom_call.1} parent=1 // pred_check
      _
    $region7: #{tpu_custom_call.1} parent=1 // pred_check_branch
      %24 = sbr.rel (0) target = $region9
    $region8: #{tpu_custom_call.1} parent=1 // pred_region
      %s26 = ssub.s32 256, 256
      %27 = vsyncadd [#allocation6], %s26
      %s28 = sshll.u32 [#allocation5], 4
      %s29 = int_to_ptr.vmem [resolvable:$true] %s28
      %34 = dma.hbm_to_vmem [thread:$0]  %s1, 256, %s29, [#allocation6], 64, 64, 4
    $region9: #{tpu_custom_call.1} parent=1 // pred_fallthru
      _
    // Predicated region
    $region10: #{tpu_custom_call.1} parent=1 // pred_check
      _
    $region11: #{tpu_custom_call.1} parent=1 // pred_check_branch
      %36 = sbr.rel (0) target = $region13
    $region12: #{tpu_custom_call.1} parent=1 // pred_region
      _
    $region13: #{tpu_custom_call.1} parent=1 // pred_fallthru
      _
    // Predicated region
    $region14: #{tpu_custom_call.1} parent=1 // pred_check
      _
    $region15: #{tpu_custom_call.1} parent=1 // pred_check_branch
      %38 = sbr.rel (0) target = $region17
    $region16: #{tpu_custom_call.1} parent=1 // pred_region
      %s40 = ssub.s32 1024, 1024
      %41 = vsyncadd [#allocation6], %s40
      %s42 = sshll.u32 [#allocation7], 4
      %s43 = int_to_ptr.vmem [resolvable:$true] %s42
      %48 = dma.hbm_to_vmem [thread:$0]  %s3, 1024, %s43, [#allocation6], 64, 64, 4
    $region17: #{tpu_custom_call.1} parent=1 // pred_fallthru
      _
    // Predicated region
    $region18: #{tpu_custom_call.1} parent=1 // pred_check
      _
    $region19: #{tpu_custom_call.1} parent=1 // pred_check_branch
      %50 = sbr.rel (0) target = $region21
    $region20: #{tpu_custom_call.1} parent=1 // pred_region
      _
    $region21: #{tpu_custom_call.1} parent=1 // pred_fallthru
      _
    // Predicated region
    $region22: #{tpu_custom_call.1} parent=1 // pred_check
      _
    $region23: #{tpu_custom_call.1} parent=1 // pred_check_branch
      %52 = sbr.rel (0) target = $region25
    $region24: #{tpu_custom_call.1} parent=1 // pred_region
      %53 = dma.done [#allocation3], 64
    $region25: #{tpu_custom_call.1} parent=1 // pred_fallthru
      _
    // Predicated region
    $region26: #{tpu_custom_call.1} parent=1 // pred_check
      _
    $region27: #{tpu_custom_call.1} parent=1 // pred_check_branch
      %55 = sbr.rel (0) target = $region29
    $region28: #{tpu_custom_call.1} parent=1 // pred_region
      %56 = dma.done [#allocation6], 256
    $region29: #{tpu_custom_call.1} parent=1 // pred_fallthru
      _
    // Predicated region
    $region30: #{tpu_custom_call.1} parent=1 // pred_check
      _
    $region31: #{tpu_custom_call.1} parent=1 // pred_check_branch
      %58 = sbr.rel (0) target = $region33
    $region32: #{tpu_custom_call.1} parent=1 // pred_region
      %59 = dma.done [#allocation6], 1024
    $region33: #{tpu_custom_call.1} parent=1 // pred_fallthru
      _
    %v61 = vld [vmem:[#allocation2] sm:$0xf]
    %v62 = vld [vmem:[#allocation5] sm:$0xf]
    %v63 = vld [vmem:[#allocation5 + $0x4] sm:$0xf]
    %v64 = vld [vmem:[#allocation5 + $0x8] sm:$0xf]
    %v65 = vld [vmem:[#allocation5 + $0xc] sm:$0xf]
    %v66 = vld [vmem:[%s2] sm:$0x1]
    %v68 = vlaneseq
    %v69 = vshrl.u32 %v68, 7
    %v70 = vsub.s32 0, %v69
    %v71 = vrot.slane %v66, %v70
    %v77 = vunpack.c.l.b16 %v62
    %v78 = vunpack.c.l.b16 %v63
    %v79 = vunpack.c.l.b16 %v64
    %v80 = vunpack.c.l.b16 %v65
    %v81 = vpack.c.b16 %v78, %v77
    %v82 = vpack.c.b16 %v80, %v79
    %vm85 = vcmask 261120
    %v87 = vsel %vm85, %v61, 0
    %89 = vmatprep.subr.bf16.mxu0 0
    %90 = vmatpush1.bf16.msra.mxu0 %v81
    %91 = vmatprep.subr.bf16.mxu0 0
    %92 = vmatpush1.bf16.msra.mxu0 %v82
    %93 = vmatprep.subr.bf16.mxu0 0
    %94 = vmatpush1.bf16.msra.mxu0 0
    %95 = vmatprep.subr.bf16.mxu0 0
    %96 = vmatpush1.bf16.msra.mxu0 0
    %97 = vmatprep.subr.bf16.mxu0 0
    %98 = vmatpush1.bf16.msra.mxu0 0
    %99 = vmatprep.subr.bf16.mxu0 0
    %100 = vmatpush1.bf16.msra.mxu0 0
    %101 = vmatprep.subr.bf16.mxu0 0
    %102 = vmatpush1.bf16.msra.mxu0 0
    %103 = vmatprep.subr.bf16.mxu0 0
    %104 = vmatpush1.bf16.msra.mxu0 0
    %105 = vmatprep.subr.bf16.mxu0 0
    %106 = vmatpush1.bf16.msra.mxu0 0
    %107 = vmatprep.subr.bf16.mxu0 0
    %108 = vmatpush1.bf16.msra.mxu0 0
    %109 = vmatprep.subr.bf16.mxu0 0
    %110 = vmatpush1.bf16.msra.mxu0 0
    %111 = vmatprep.subr.bf16.mxu0 0
    %112 = vmatpush1.bf16.msra.mxu0 0
    %113 = vmatprep.subr.bf16.mxu0 0
    %114 = vmatpush1.bf16.msra.mxu0 0
    %115 = vmatprep.subr.bf16.mxu0 0
    %116 = vmatpush1.bf16.msra.mxu0 0
    %117 = vmatprep.subr.bf16.mxu0 0
    %118 = vmatpush1.bf16.msra.mxu0 0
    %119 = vmatprep.subr.bf16.mxu0 0
    %120 = vmatpush1.bf16.msra.mxu0 0
    %121 = vmatprep.mubr.bf16.mxu0 0
    %122 = vmatmul.mubr.bf16.gmra.mrb[0].mxu0 %v87
    %v123 = vpop.f32.mrb[0].mxu0
    %v124 = vadd.f32 %v71, %v123
    %v125 = vpop.f32.mrb[0].mxu0
    %v126 = vpop.f32.mrb[0].mxu0
    %v127 = vpop.f32.mrb[0].mxu0
    %128 = vdwg.mxu0
    %v129 = vxor.u32 %v124, 2147483648
    %v130 = vmul.f32 %v129, 1.442695
    %v131 = vpow.pop %v130
    %v132 = vadd.f32 %v131, 1.0
    %v133 = vrcp.pop %v132
    %v134 = vmul.f32 1.0, %v133
    %v135 = vmul.f32 %v124, %v134
    %v136 = vpack.c.bf16 %v135, %v135
    %v137 = vld [vmem:[#allocation7] sm:$0xf]
    %v138 = vld [vmem:[#allocation7 + $0x4] sm:$0xf]
    %v139 = vld [vmem:[#allocation7 + $0x8] sm:$0xf]
    %v140 = vld [vmem:[#allocation7 + $0xc] sm:$0xf]
    %v141 = vld [vmem:[#allocation7 + $0x10] sm:$0xf]
    %v142 = vld [vmem:[#allocation7 + $0x14] sm:$0xf]
    %v143 = vld [vmem:[#allocation7 + $0x18] sm:$0xf]
    %v144 = vld [vmem:[#allocation7 + $0x1c] sm:$0xf]
    %v145 = vld [vmem:[#allocation7 + $0x20] sm:$0xf]
    %v146 = vld [vmem:[#allocation7 + $0x24] sm:$0xf]
    %v147 = vld [vmem:[#allocation7 + $0x28] sm:$0xf]
    %v148 = vld [vmem:[#allocation7 + $0x2c] sm:$0xf]
    %v149 = vld [vmem:[#allocation7 + $0x30] sm:$0xf]
    %v150 = vld [vmem:[#allocation7 + $0x34] sm:$0xf]
    %v151 = vld [vmem:[#allocation7 + $0x38] sm:$0xf]
    %v152 = vld [vmem:[#allocation7 + $0x3c] sm:$0xf]
    %v153 = vld [vmem:[%s4] sm:$0x1]
    %v155 = vlaneseq
    %v156 = vshrl.u32 %v155, 7
    %v157 = vsub.s32 0, %v156
    %v158 = vrot.slane %v153, %v157
    %v176 = vunpack.c.l.b16 %v137
    %v177 = vunpack.c.l.b16 %v138
    %v178 = vunpack.c.l.b16 %v139
    %v179 = vunpack.c.l.b16 %v140
    %v180 = vunpack.c.l.b16 %v141
    %v181 = vunpack.c.l.b16 %v142
    %v182 = vunpack.c.l.b16 %v143
    %v183 = vunpack.c.l.b16 %v144
    %v184 = vunpack.c.l.b16 %v145
    %v185 = vunpack.c.l.b16 %v146
    %v186 = vunpack.c.l.b16 %v147
    %v187 = vunpack.c.l.b16 %v148
    %v188 = vunpack.c.l.b16 %v149
    %v189 = vunpack.c.l.b16 %v150
    %v190 = vunpack.c.l.b16 %v151
    %v191 = vunpack.c.l.b16 %v152
    %v192 = vpack.c.b16 %v177, %v176
    %v193 = vpack.c.b16 %v179, %v178
    %v194 = vpack.c.b16 %v181, %v180
    %v195 = vpack.c.b16 %v183, %v182
    %v196 = vpack.c.b16 %v185, %v184
    %v197 = vpack.c.b16 %v187, %v186
    %v198 = vpack.c.b16 %v189, %v188
    %v199 = vpack.c.b16 %v191, %v190
    %208 = vmatprep.subr.bf16.mxu0 0
    %209 = vmatpush1.bf16.msra.mxu0 %v192
    %210 = vmatprep.subr.bf16.mxu0 0
    %211 = vmatpush1.bf16.msra.mxu0 %v193
    %212 = vmatprep.subr.bf16.mxu0 0
    %213 = vmatpush1.bf16.msra.mxu0 %v194
    %214 = vmatprep.subr.bf16.mxu0 0
    %215 = vmatpush1.bf16.msra.mxu0 %v195
    %216 = vmatprep.subr.bf16.mxu0 0
    %217 = vmatpush1.bf16.msra.mxu0 %v196
    %218 = vmatprep.subr.bf16.mxu0 0
    %219 = vmatpush1.bf16.msra.mxu0 %v197
    %220 = vmatprep.subr.bf16.mxu0 0
    %221 = vmatpush1.bf16.msra.mxu0 %v198
    %222 = vmatprep.subr.bf16.mxu0 0
    %223 = vmatpush1.bf16.msra.mxu0 %v199
    %224 = vmatprep.subr.bf16.mxu0 0
    %225 = vmatpush1.bf16.msra.mxu0 0
    %226 = vmatprep.subr.bf16.mxu0 0
    %227 = vmatpush1.bf16.msra.mxu0 0
    %228 = vmatprep.subr.bf16.mxu0 0
    %229 = vmatpush1.bf16.msra.mxu0 0
    %230 = vmatprep.subr.bf16.mxu0 0
    %231 = vmatpush1.bf16.msra.mxu0 0
    %232 = vmatprep.subr.bf16.mxu0 0
    %233 = vmatpush1.bf16.msra.mxu0 0
    %234 = vmatprep.subr.bf16.mxu0 0
    %235 = vmatpush1.bf16.msra.mxu0 0
    %236 = vmatprep.subr.bf16.mxu0 0
    %237 = vmatpush1.bf16.msra.mxu0 0
    %238 = vmatprep.subr.bf16.mxu0 0
    %239 = vmatpush1.bf16.msra.mxu0 0
    %240 = vmatprep.mubr.bf16.mxu0 0
    %241 = vmatmul.mubr.bf16.gmra.mrb[0].mxu0 %v136
    %v242 = vpop.f32.mrb[0].mxu0
    %v243 = vadd.f32 %v158, %v242
    %v244 = vpop.f32.mrb[0].mxu0
    %v245 = vpop.f32.mrb[0].mxu0
    %v246 = vpop.f32.mrb[0].mxu0
    %247 = vdwg.mxu0
    %v248 = vpack.c.bf16 %v243, %v243
    %249 = vst [vmem:[#allocation8] sm:$0xf] %v248
    // Predicated region
    $region34: #{tpu_custom_call.1} parent=1 // pred_check
      _
    $region35: #{tpu_custom_call.1} parent=1 // pred_check_branch
      %251 = sbr.rel (0) target = $region37
    $region36: #{tpu_custom_call.1} parent=1 // pred_region
      %s253 = ssub.s32 64, 64
      %254 = vsyncadd [#allocation4], %s253
      %s256 = sshll.u32 [#allocation8], 4
      %s257 = int_to_ptr.vmem [resolvable:$true] %s256
      %259 = dma.vmem_to_hbm [thread:$0]  %s257, 64, %s5, [#allocation4]
    $region37: #{tpu_custom_call.1} parent=1 // pred_fallthru
      _
    // Predicated region
    $region38: #{tpu_custom_call.1} parent=1 // pred_check
      _
    $region39: #{tpu_custom_call.1} parent=1 // pred_check_branch
      %261 = sbr.rel (0) target = $region41
    $region40: #{tpu_custom_call.1} parent=1 // pred_region
      %262 = dma.done [#allocation4], 64
    $region41: #{tpu_custom_call.1} parent=1 // pred_fallthru
      _
    %263 = vsyncpa [#allocation3], 1
    %264 = vsyncpa [#allocation6], 1
    %265 = vsyncpa [#allocation4], 1

</llo_original>
